<compile_context>
chip_gen: v5e
topology: v5e:2x2
jax: 0.10.0
libtpu: 0.0.40
codegen_flags: <defaults>
</compile_context>

<pallas_src>
import jax
import jax.numpy as jnp
from jax import lax
from jax.experimental import pallas as pl
from jax.experimental.pallas import tpu as pltpu


def _mfe_kernel(x_ref, w_ref, b_ref, o_ref):
    # x_ref: (TM, K), w_ref: (K, N), b_ref: (1, N), o_ref: (TM, N)
    y = jnp.dot(
        x_ref[...], w_ref[...],
        preferred_element_type=jnp.float32,
        precision=lax.Precision.HIGHEST,
    )
    y = y + b_ref[...]                       # broadcast bias over rows (f32)
    o_ref[...] = jnp.maximum(y, 0.0).astype(o_ref.dtype)


def motion_feature_extractor(x, weight, bias, *, tile_m=2048):
    """Pallas implementation of relu(x @ weight.T + bias).

    x:      (batch, seq, input_dim)  float32
    weight: (motion_dim, input_dim)  float32   (PyTorch nn.Linear convention)
    bias:   (motion_dim,)            float32
    returns (batch, seq, motion_dim) float32
    """
    batch, seq, input_dim = x.shape
    motion_dim, k_in = weight.shape
    assert k_in == input_dim

    # One-time HBM-side transpose (tiny array) -> plain NN contraction in-kernel.
    w_t = weight.T                           # (input_dim, motion_dim)
    b2d = bias.reshape(1, motion_dim)

    # Flatten batched axes into the tiled M dimension.
    x2d = x.reshape(batch * seq, input_dim)
    M, K = x2d.shape

    # Tile M:
    #   * aim for >= 2 grid blocks so dimension_semantics=("parallel",) really
    #     shards across v7x's 2 TensorCores,
    #   * keep TM a multiple of 8 (sublanes) unless it equals M,
    #   * cap at tile_m (default 2048): double-buffered working set stays well
    #     under v5e's 16 MiB scoped VMEM even with the K=32 x-tile lane-padded.
    half_m = ((pl.cdiv(M, 2) + 7) // 8) * 8  # cdiv(M,2) rounded up to 8
    TM = min(tile_m, half_m, M)
    grid_m = pl.cdiv(M, TM)

    cost = pl.CostEstimate(
        flops=2 * M * K * motion_dim,
        bytes_accessed=4 * (M * K + M * motion_dim + K * motion_dim + motion_dim),
        transcendentals=0,
    )

    out2d = pl.pallas_call(
        _mfe_kernel,
        out_shape=jax.ShapeDtypeStruct((M, motion_dim), x.dtype),
        grid=(grid_m,),
        in_specs=[
            pl.BlockSpec((TM, K), lambda i: (i, 0)),            # x tile, pipelined
            pl.BlockSpec((K, motion_dim), lambda i: (0, 0)),    # weight, VMEM-resident
            pl.BlockSpec((1, motion_dim), lambda i: (0, 0)),    # bias, VMEM-resident
        ],
        out_specs=pl.BlockSpec((TM, motion_dim), lambda i: (i, 0)),
        compiler_params=pltpu.CompilerParams(
            # Independent M-tiles -> shardable across v7x's 2 TensorCores.
            dimension_semantics=("parallel",),
        ),
        cost_estimate=cost,
    )(x2d, w_t, b2d)

    return out2d.reshape(batch, seq, motion_dim)


def _reference(x, weight, bias):
    return jnp.maximum(jnp.einsum("bsk,nk->bsn", x, weight) + bias, 0.0)


if __name__ == "__main__":
    # Small shapes consistent with the module's forward.
    batch, seq = 2, 8
    input_dim, motion_dim = 32, 64

    key = jax.random.PRNGKey(0)
    kx, kw, kb = jax.random.split(key, 3)

    # Deterministic parameter init (synthetic; mimics nn.Linear scale).
    bound = 1.0 / (input_dim ** 0.5)
    weight = jax.random.uniform(kw, (motion_dim, input_dim),
                                minval=-bound, maxval=bound, dtype=jnp.float32)
    bias = jax.random.uniform(kb, (motion_dim,),
                              minval=-bound, maxval=bound, dtype=jnp.float32)

    x = jax.random.normal(kx, (batch, seq, input_dim), dtype=jnp.float32)

    out = motion_feature_extractor(x, weight, bias)
    out = jax.block_until_ready(out)

    # Correctness check vs pure-JAX reference.
    ref = _reference(x, weight, bias)
    assert out.shape == (batch, seq, motion_dim)
    assert jnp.allclose(out, ref, atol=1e-5, rtol=1e-5), "mismatch vs reference"

    print("KERNEL_OK")
</pallas_src>

<mosaic_0001>
module attributes {stable_mosaic.version = 11 : i64} {
  func.func @_mfe_kernel(%arg0: i32, %arg1: memref<8x32xf32, #tpu.memory_space<vmem>>, %arg2: memref<32x64xf32, #tpu.memory_space<vmem>>, %arg3: memref<1x64xf32, #tpu.memory_space<vmem>>, %arg4: memref<8x64xf32, #tpu.memory_space<vmem>>) attributes {dimension_semantics = [#tpu.dimension_semantics<parallel>], iteration_bounds = array<i64: 2>, scalar_prefetch = 0 : i64, scratch_operands = 0 : i64, tpu.core_type = #tpu.core_type<tc>, window_params = [{transform_indices = @transform_0, window_bounds = array<i64: 8, 32>}, {pipeline_mode = #tpu.pipeline_mode<synchronous>, transform_indices = @transform_1, window_bounds = array<i64: 32, 64>}, {pipeline_mode = #tpu.pipeline_mode<synchronous>, transform_indices = @transform_2, window_bounds = array<i64: 1, 64>}, {transform_indices = @transform_3, window_bounds = array<i64: 8, 64>}]} {
    %c0 = arith.constant 0 : index
    %c0_0 = arith.constant 0 : index
    %0 = vector.load %arg1[%c0, %c0_0] : memref<8x32xf32, #tpu.memory_space<vmem>>, vector<8x32xf32>
    %c0_1 = arith.constant 0 : index
    %c0_2 = arith.constant 0 : index
    %1 = vector.load %arg2[%c0_1, %c0_2] : memref<32x64xf32, #tpu.memory_space<vmem>>, vector<32x64xf32>
    %cst = arith.constant dense<0.000000e+00> : vector<8x64xf32>
    %2 = tpu.matmul %0, %1, %cst {dimension_numbers = #tpu.dot_dimension_numbers<[1], [0], [0], [1], [0, 0, 1, 1], [], []>, precision = #tpu.contract_precision<fp32>} : vector<8x32xf32>, vector<32x64xf32>, vector<8x64xf32> -> vector<8x64xf32>
    %c0_3 = arith.constant 0 : index
    %c0_4 = arith.constant 0 : index
    %3 = vector.load %arg3[%c0_3, %c0_4] : memref<1x64xf32, #tpu.memory_space<vmem>>, vector<1x64xf32>
    %4 = vector.broadcast %3 : vector<1x64xf32> to vector<8x64xf32>
    %5 = arith.addf %2, %4 : vector<8x64xf32>
    %cst_5 = arith.constant 0.000000e+00 : f32
    %6 = vector.broadcast %cst_5 : f32 to vector<8x64xf32>
    %7 = arith.maximumf %5, %6 : vector<8x64xf32>
    %c0_6 = arith.constant 0 : index
    %c0_7 = arith.constant 0 : index
    %8 = vector.load %arg4[%c0_6, %c0_7] : memref<8x64xf32, #tpu.memory_space<vmem>>, vector<8x64xf32>
    tpu.vector_store %arg4[%c0_6, %c0_7], %7 {strides = array<i32>} : memref<8x64xf32, #tpu.memory_space<vmem>>, vector<8x64xf32>,
    return
  }
  func.func @transform_0(%arg0: i32) -> (i32, i32) {
    %c0_i32 = arith.constant 0 : i32
    %c0_i32_0 = arith.constant 0 : i32
    return %arg0, %c0_i32 : i32, i32
  }
  func.func @transform_1(%arg0: i32) -> (i32, i32) {
    %c0_i32 = arith.constant 0 : i32
    %c0_i32_0 = arith.constant 0 : i32
    %c0_i32_1 = arith.constant 0 : i32
    return %c0_i32, %c0_i32_0 : i32, i32
  }
  func.func @transform_2(%arg0: i32) -> (i32, i32) {
    %c0_i32 = arith.constant 0 : i32
    %c0_i32_0 = arith.constant 0 : i32
    %c0_i32_1 = arith.constant 0 : i32
    return %c0_i32, %c0_i32_0 : i32, i32
  }
  func.func @transform_3(%arg0: i32) -> (i32, i32) {
    %c0_i32 = arith.constant 0 : i32
    %c0_i32_0 = arith.constant 0 : i32
    return %arg0, %c0_i32 : i32, i32
  }
}

</mosaic_0001>

<llo_original>
// kernel: tpu_custom_call.1
$region0: #{tpu_custom_call.1}
  #allocation0 [shape = 'u32[]', space=smem, size = 0x4, offset = 0x4, fixed_abs, tag = 'smem constant byte address 0x4 - core index']
  #allocation1 [shape = 'u32[72,128]{1,0:T(1,128)}', space=vmem, size = 0x9000, scoped, tag = 'internal scratch']
  %s0 = inlined_call_operand.hbm [shape: f32[16,32], index: 0, kind: input, shape index: {}]
  %s1 = inlined_call_operand.hbm [shape: f32[32,64], index: 1, kind: input, shape index: {}]
  %s2 = inlined_call_operand.vmem [shape: f32[1,64], index: 2, kind: input, shape index: {}]
  %s3 = inlined_call_operand.hbm [shape: f32[16,64], index: 3, kind: output, shape index: {}]
  %s4 = sld [smem:[#allocation0]]
  $region53: #{tpu_custom_call.1} parent=0
    _
  %s6 = ssub.s32 1, %s4
  %s7 = scalar_select 0, %s6, %s4
  $region1: #{tpu_custom_call.1} parent=0
    #allocation2 [shape = 'u8[8192]{0}', space=vmem, size = 0x2000, scoped, tag = 'input window, operand 0']
    #allocation3 [shape = 's32[2]{0}', space=sflag, size = 0x8, scoped, tag = 'scoped memory for tpu_custom_call.1']
    #allocation4 [shape = 's32[2]{0}', space=sflag, size = 0x8, scoped, tag = 'scoped memory for tpu_custom_call.1']
    #allocation5 [shape = 'u8[16384]{0}', space=vmem, size = 0x4000, scoped, tag = 'input window, operand 1, single buffered']
    #allocation6 [shape = 's32[1]{0}', space=sflag, size = 0x4, scoped, tag = 'scoped memory for tpu_custom_call.1']
    #allocation7 [shape = 'u8[8192]{0}', space=vmem, size = 0x2000, scoped, tag = 'output window, operand 0']
    %8 = vsyncpa [#allocation3], 0
    %s9 = scalar_lea.sflag [#allocation3], 1
    %10 = vsyncpa %s9, 0
    %11 = vsyncpa [#allocation6], 0
    %12 = vsyncpa [#allocation4], 0
    %s13 = scalar_lea.sflag [#allocation4], 1
    %14 = vsyncpa %s13, 0
    loop: start=0, step=1, limit=4
    $region2: #{tpu_custom_call.1} parent=1 // loop_pre_header
      _
    $region3: #{tpu_custom_call.1} parent=1 // loop_header
      %s16 = sphi 0, %s20
      %p17 = scmp.ge.s32.totalorder %s16, 4
      %s26 = sphi 0, %s28
      %s29 = sphi 0, %s26
      %s30 = sphi 0, %s29
      %s46 = sphi 0, %s30
      %s50 = sphi 0, %s50
      %s52 = sphi 0, %s50
      %s53 = sphi 0, %s52
      %s67 = sphi 0, %s53
      %s71 = sphi 0, %s71
      %s73 = sphi 0, %s71
      %s74 = sphi 0, %s73
      %s88 = sphi 0, %s74
      %s94 = sphi 0, %s96
      %s97 = sphi 0, %s94
      %s98 = sphi 0, %s97
      %s114 = sphi 0, %s98
    $region4: #{tpu_custom_call.1} parent=1 // loop_header_branch
      %19 = sbr.rel (%p17) target = $region8
    $region5: #{tpu_custom_call.1} parent=1 // loop_body
      %s21 = ssub.s32 %s16, 1
      %s22 = ssub.s32 %s16, 2
      %s23 = sadd.s32 %s16, 1
      %s24 = ssub.s32 %s16, %s23
      %p25 = scmp.eq.s32.totalorder %s24, 0
      %s27 = sadd.s32 %s26, 1
      %s28 = scalar_select %p25, %s26, %s27
      %p31 = pneg %p25
      %p32 = scmp.eq.s32.totalorder %s16, 1
      %p33 = por %p31, %p32
      %p34 = scmp.ne.s32.totalorder %s26, %s29
      %p35 = scmp.eq.s32.totalorder %s16, 0
      %p36 = por %p34, %p35
      %p37 = scmp.ne.s32.totalorder %s26, %s29
      %p38 = scmp.eq.s32.totalorder %s21, 1
      %p39 = por %p37, %p38
      %p40 = scmp.ne.s32.totalorder %s29, %s30
      %p41 = scmp.eq.s32.totalorder %s21, 0
      %p42 = por %p40, %p41
      %p43 = scmp.ne.s32.totalorder %s29, %s30
      %p44 = scmp.eq.s32.totalorder %s22, 1
      %p45 = por %p43, %p44
      %p47 = scmp.ne.s32.totalorder %s30, %s46
      %p48 = scmp.eq.s32.totalorder %s22, 0
      %p49 = por %p47, %p48
      %s51 = sadd.s32 %s50, 1
      %p54 = scmp.eq.s32.totalorder %s16, 1
      %p55 = scmp.ne.s32.totalorder %s50, %s52
      %p56 = scmp.eq.s32.totalorder %s16, 0
      %p57 = por %p55, %p56
      %p58 = scmp.ne.s32.totalorder %s50, %s52
      %p59 = scmp.eq.s32.totalorder %s21, 1
      %p60 = por %p58, %p59
      %p61 = scmp.ne.s32.totalorder %s52, %s53
      %p62 = scmp.eq.s32.totalorder %s21, 0
      %p63 = por %p61, %p62
      %p64 = scmp.ne.s32.totalorder %s52, %s53
      %p65 = scmp.eq.s32.totalorder %s22, 1
      %p66 = por %p64, %p65
      %p68 = scmp.ne.s32.totalorder %s53, %s67
      %p69 = scmp.eq.s32.totalorder %s22, 0
      %p70 = por %p68, %p69
      %s72 = sadd.s32 %s71, 1
      %p75 = scmp.eq.s32.totalorder %s16, 1
      %p76 = scmp.ne.s32.totalorder %s71, %s73
      %p77 = scmp.eq.s32.totalorder %s16, 0
      %p78 = por %p76, %p77
      %p79 = scmp.ne.s32.totalorder %s71, %s73
      %p80 = scmp.eq.s32.totalorder %s21, 1
      %p81 = por %p79, %p80
      %p82 = scmp.ne.s32.totalorder %s73, %s74
      %p83 = scmp.eq.s32.totalorder %s21, 0
      %p84 = por %p82, %p83
      %p85 = scmp.ne.s32.totalorder %s73, %s74
      %p86 = scmp.eq.s32.totalorder %s22, 1
      %p87 = por %p85, %p86
      %p89 = scmp.ne.s32.totalorder %s74, %s88
      %p90 = scmp.eq.s32.totalorder %s22, 0
      %p91 = por %p89, %p90
      %s92 = ssub.s32 %s16, %s23
      %p93 = scmp.eq.s32.totalorder %s92, 0
      %s95 = sadd.s32 %s94, 1
      %s96 = scalar_select %p93, %s94, %s95
      %p99 = pneg %p93
      %p100 = scmp.eq.s32.totalorder %s16, 1
      %p101 = por %p99, %p100
      %p102 = scmp.ne.s32.totalorder %s94, %s97
      %p103 = scmp.eq.s32.totalorder %s16, 0
      %p104 = por %p102, %p103
      %p105 = scmp.ne.s32.totalorder %s94, %s97
      %p106 = scmp.eq.s32.totalorder %s21, 1
      %p107 = por %p105, %p106
      %p108 = scmp.ne.s32.totalorder %s97, %s98
      %p109 = scmp.eq.s32.totalorder %s21, 0
      %p110 = por %p108, %p109
      %p111 = scmp.ne.s32.totalorder %s97, %s98
      %p112 = scmp.eq.s32.totalorder %s22, 1
      %p113 = por %p111, %p112
      %p115 = scmp.ne.s32.totalorder %s98, %s114
      %p116 = scmp.eq.s32.totalorder %s22, 0
      %p117 = por %p115, %p116
      %p118 = scmp.le.s32.totalorder 1, %s16
      %p119 = scmp.lt.s32.totalorder %s16, 3
      %p120 = pnand %p118, %p119
      %p121 = pneg %p120
      // Predicated region
      $region9: #{tpu_custom_call.1} parent=5 // pred_check
        _
      $region10: #{tpu_custom_call.1} parent=5 // pred_check_branch
        %123 = sbr.rel (%p120) target = $region12
      $region11: #{tpu_custom_call.1} parent=5 // pred_region
        %s124 = ssub.s32 %s16, 1
        // Predicated region
        $region13: #{tpu_custom_call.1} parent=11 // pred_check
          %p125 = pneg %p63
        $region14: #{tpu_custom_call.1} parent=11 // pred_check_branch
          %127 = sbr.rel (%p125) target = $region16
        $region15: #{tpu_custom_call.1} parent=11 // pred_region
          %129 = vsyncadd [#allocation6], 0
          %s130 = sshll.u32 %s1, 4
          %s131 = int_to_ptr.hbm [resolvable:$true] %s130
          %s132 = sshll.u32 [#allocation5], 4
          %s133 = int_to_ptr.vmem [resolvable:$true] %s132
          %138 = dma.hbm_to_vmem [thread:$0]  %s131, 512, %s133, [#allocation6], 128, 128, 8
        $region16: #{tpu_custom_call.1} parent=11 // pred_fallthru
          _
        // Predicated region
        $region17: #{tpu_custom_call.1} parent=11 // pred_check
          %p139 = pneg %p84
        $region18: #{tpu_custom_call.1} parent=11 // pred_check_branch
          %141 = sbr.rel (%p139) target = $region20
        $region19: #{tpu_custom_call.1} parent=11 // pred_region
          _
        $region20: #{tpu_custom_call.1} parent=11 // pred_fallthru
          _
      $region12: #{tpu_custom_call.1} parent=5 // pred_fallthru
        _
      %p142 = scmp.lt.s32.totalorder %s16, 2
      // Predicated region
      $region21: #{tpu_custom_call.1} parent=5 // pred_check
        %p143 = pneg %p142
      $region22: #{tpu_custom_call.1} parent=5 // pred_check_branch
        %145 = sbr.rel (%p143) target = $region24
      $region23: #{tpu_custom_call.1} parent=5 // pred_region
        // Predicated region
        $region25: #{tpu_custom_call.1} parent=23 // pred_check
          %p146 = pneg %p36
        $region26: #{tpu_custom_call.1} parent=23 // pred_check_branch
          %148 = sbr.rel (%p146) target = $region28
        $region27: #{tpu_custom_call.1} parent=23 // pred_region
          %s149 = sand.u32 %s26, 1
          %s150 = scalar_lea.sflag [#allocation3], %s149
          %s151 = sand.u32 %s26, 1
          %s152 = smul.addr %s151, 8
          %s153 = scalar_lea.vmem [#allocation2], %s152
          %155 = vsyncadd %s150, 0
          %s156 = smul.addr %s16, 8
          %s157 = scalar_lea.hbm %s0, %s156
          %s159 = sshll.u32 %s157, 4
          %s160 = int_to_ptr.hbm [resolvable:$true] %s159
          %s161 = sshll.u32 %s153, 4
          %s162 = int_to_ptr.vmem [resolvable:$true] %s161
          %164 = dma.hbm_to_vmem [thread:$0]  %s160, 128, %s162, %s150
        $region28: #{tpu_custom_call.1} parent=23 // pred_fallthru
          _
      $region24: #{tpu_custom_call.1} parent=5 // pred_fallthru
        _
      %p165 = scmp.le.s32.totalorder 1, %s16
      %p166 = scmp.lt.s32.totalorder %s16, 3
      %p167 = pnand %p165, %p166
      %p168 = pneg %p167
      // Predicated region
      $region29: #{tpu_custom_call.1} parent=5 // pred_check
        _
      $region30: #{tpu_custom_call.1} parent=5 // pred_check_branch
        %170 = sbr.rel (%p167) target = $region32
      $region31: #{tpu_custom_call.1} parent=5 // pred_region
        %s171 = ssub.s32 %s16, 1
        %s172 = sand.u32 %s29, 1
        %s173 = scalar_lea.sflag [#allocation3], %s172
        %s174 = sand.u32 %s29, 1
        %s175 = smul.addr %s174, 8
        %s176 = scalar_lea.vmem [#allocation2], %s175
        // Predicated region
        $region33: #{tpu_custom_call.1} parent=31 // pred_check
          %p177 = pneg %p42
        $region34: #{tpu_custom_call.1} parent=31 // pred_check_branch
          %179 = sbr.rel (%p177) target = $region36
        $region35: #{tpu_custom_call.1} parent=31 // pred_region
          %181 = dma.done %s173, 128
        $region36: #{tpu_custom_call.1} parent=31 // pred_fallthru
          _
        // Predicated region
        $region37: #{tpu_custom_call.1} parent=31 // pred_check
          %p182 = pneg %p63
        $region38: #{tpu_custom_call.1} parent=31 // pred_check_branch
          %184 = sbr.rel (%p182) target = $region40
        $region39: #{tpu_custom_call.1} parent=31 // pred_region
          %186 = dma.done [#allocation6], 512
        $region40: #{tpu_custom_call.1} parent=31 // pred_fallthru
          _
        %s187 = sand.u32 %s29, 1
        %s188 = scalar_lea.sflag [#allocation3], %s187
        %s189 = sand.u32 %s29, 1
        %s190 = smul.addr %s189, 8
        %s191 = scalar_lea.vmem [#allocation2], %s190
        %p192 = pneg %p42
        %p193 = pneg %p39
        %p194 = pneg %p63
        %p195 = pneg %p60
        %p196 = pneg %p84
        %p197 = pneg %p81
        %p198 = pneg %p110
        %p199 = pneg %p107
        %s200 = sand.u32 %s97, 1
        %s201 = scalar_lea.sflag [#allocation4], %s200
        %s202 = sand.u32 %s97, 1
        %s203 = smul.addr %s202, 8
        %s204 = scalar_lea.vmem [#allocation7], %s203
        %v205 = vld [vmem:[%s176] sm:$0xff]
        %v206 = vld [vmem:[#allocation5] sm:$0xff]
        %v207 = vld [vmem:[#allocation5 + $0x8] sm:$0xff]
        %v208 = vld [vmem:[#allocation5 + $0x10] sm:$0xff]
        %v209 = vld [vmem:[#allocation5 + $0x18] sm:$0xff]
        %v210 = vld [vmem:[%s2] sm:$0x1]
        %v212 = vperm.slane %v210, 0
        %vm214 = vcmask 261120
        %v216 = vsel %vm214, %v205, 0
        %218 = vmatpush.msra.mxu0 0.0
        %219 = vmatpush.msra.mxu0 0.0
        %220 = vmatpush.msra.mxu0 0.0
        %221 = vmatpush.msra.mxu0 0.0
        %222 = vmatpush.msra.mxu0 0.0
        %223 = vmatpush.msra.mxu0 0.0
        %224 = vmatpush.msra.mxu0 0.0
        %225 = vmatpush.msra.mxu0 0.0
        %226 = vmatpush.msra.mxu0 0.0
        %227 = vmatpush.msra.mxu0 0.0
        %228 = vmatpush.msra.mxu0 0.0
        %229 = vmatpush.msra.mxu0 0.0
        %v230 = vand.u32 %v209, 4294901760
        %231 = vmatpush.msra.mxu0 %v230
        %v232 = vand.u32 %v208, 4294901760
        %233 = vmatpush.msra.mxu0 %v232
        %v234 = vand.u32 %v207, 4294901760
        %235 = vmatpush.msra.mxu0 %v234
        %v236 = vand.u32 %v206, 4294901760
        %237 = vmatpush.msra.mxu0 %v236
        %v238 = vand.u32 %v216, 4294901760
        %v239 = vsub.f32 %v216, %v238
        %v240 = vand.u32 %v239, 4294901760
        %v241 = vsub.f32 %v239, %v240
        %v242 = vand.u32 %v241, 4294901760
        %243 = vmatmul.f32.gmra.mxu0 %v242
        %v244 = vpop.f32.mrf.mxu0
        %v245 = vadd.f32 %v212, %v244
        %246 = vdwg.mxu0
        %247 = vmatpush.msra.mxu0 0.0
        %248 = vmatpush.msra.mxu0 0.0
        %249 = vmatpush.msra.mxu0 0.0
        %250 = vmatpush.msra.mxu0 0.0
        %251 = vmatpush.msra.mxu0 0.0
        %252 = vmatpush.msra.mxu0 0.0
        %253 = vmatpush.msra.mxu0 0.0
        %254 = vmatpush.msra.mxu0 0.0
        %255 = vmatpush.msra.mxu0 0.0
        %256 = vmatpush.msra.mxu0 0.0
        %257 = vmatpush.msra.mxu0 0.0
        %258 = vmatpush.msra.mxu0 0.0
        %v259 = vand.u32 %v209, 4294901760
        %v260 = vsub.f32 %v209, %v259
        %v261 = vand.u32 %v260, 4294901760
        %v262 = vsub.f32 %v260, %v261
        %v263 = vand.u32 %v262, 4294901760
        %264 = vmatpush.msra.mxu0 %v263
        %v265 = vand.u32 %v208, 4294901760
        %v266 = vsub.f32 %v208, %v265
        %v267 = vand.u32 %v266, 4294901760
        %v268 = vsub.f32 %v266, %v267
        %v269 = vand.u32 %v268, 4294901760
        %270 = vmatpush.msra.mxu0 %v269
        %v271 = vand.u32 %v207, 4294901760
        %v272 = vsub.f32 %v207, %v271
        %v273 = vand.u32 %v272, 4294901760
        %v274 = vsub.f32 %v272, %v273
        %v275 = vand.u32 %v274, 4294901760
        %276 = vmatpush.msra.mxu0 %v275
        %v277 = vand.u32 %v206, 4294901760
        %v278 = vsub.f32 %v206, %v277
        %v279 = vand.u32 %v278, 4294901760
        %v280 = vsub.f32 %v278, %v279
        %v281 = vand.u32 %v280, 4294901760
        %282 = vmatpush.msra.mxu0 %v281
        %v283 = vand.u32 %v216, 4294901760
        %284 = vmatmul.f32.gmra.mxu0 %v283
        %v285 = vpop.f32.mrf.mxu0
        %v286 = vadd.f32 %v245, %v285
        %287 = vdwg.mxu0
        %288 = vmatpush.msra.mxu0 0.0
        %289 = vmatpush.msra.mxu0 0.0
        %290 = vmatpush.msra.mxu0 0.0
        %291 = vmatpush.msra.mxu0 0.0
        %292 = vmatpush.msra.mxu0 0.0
        %293 = vmatpush.msra.mxu0 0.0
        %294 = vmatpush.msra.mxu0 0.0
        %295 = vmatpush.msra.mxu0 0.0
        %296 = vmatpush.msra.mxu0 0.0
        %297 = vmatpush.msra.mxu0 0.0
        %298 = vmatpush.msra.mxu0 0.0
        %299 = vmatpush.msra.mxu0 0.0
        %v300 = vand.u32 %v209, 4294901760
        %v301 = vsub.f32 %v209, %v300
        %302 = vmatpush.msra.mxu0 %v301
        %v303 = vand.u32 %v208, 4294901760
        %v304 = vsub.f32 %v208, %v303
        %305 = vmatpush.msra.mxu0 %v304
        %v306 = vand.u32 %v207, 4294901760
        %v307 = vsub.f32 %v207, %v306
        %308 = vmatpush.msra.mxu0 %v307
        %v309 = vand.u32 %v206, 4294901760
        %v310 = vsub.f32 %v206, %v309
        %311 = vmatpush.msra.mxu0 %v310
        %v312 = vand.u32 %v216, 4294901760
        %v313 = vsub.f32 %v216, %v312
        %314 = vmatmul.f32.gmra.mxu0 %v313
        %v315 = vpop.f32.mrf.mxu0
        %v316 = vadd.f32 %v286, %v315
        %317 = vdwg.mxu0
        %318 = vmatpush.msra.mxu0 0.0
        %319 = vmatpush.msra.mxu0 0.0
        %320 = vmatpush.msra.mxu0 0.0
        %321 = vmatpush.msra.mxu0 0.0
        %322 = vmatpush.msra.mxu0 0.0
        %323 = vmatpush.msra.mxu0 0.0
        %324 = vmatpush.msra.mxu0 0.0
        %325 = vmatpush.msra.mxu0 0.0
        %326 = vmatpush.msra.mxu0 0.0
        %327 = vmatpush.msra.mxu0 0.0
        %328 = vmatpush.msra.mxu0 0.0
        %329 = vmatpush.msra.mxu0 0.0
        %v330 = vand.u32 %v209, 4294901760
        %331 = vmatpush.msra.mxu0 %v330
        %v332 = vand.u32 %v208, 4294901760
        %333 = vmatpush.msra.mxu0 %v332
        %v334 = vand.u32 %v207, 4294901760
        %335 = vmatpush.msra.mxu0 %v334
        %v336 = vand.u32 %v206, 4294901760
        %337 = vmatpush.msra.mxu0 %v336
        %v338 = vand.u32 %v216, 4294901760
        %v339 = vsub.f32 %v216, %v338
        %v340 = vand.u32 %v339, 4294901760
        %341 = vmatmul.f32.gmra.mxu0 %v340
        %v342 = vpop.f32.mrf.mxu0
        %v343 = vadd.f32 %v316, %v342
        %344 = vdwg.mxu0
        %345 = vmatpush.msra.mxu0 0.0
        %346 = vmatpush.msra.mxu0 0.0
        %347 = vmatpush.msra.mxu0 0.0
        %348 = vmatpush.msra.mxu0 0.0
        %349 = vmatpush.msra.mxu0 0.0
        %350 = vmatpush.msra.mxu0 0.0
        %351 = vmatpush.msra.mxu0 0.0
        %352 = vmatpush.msra.mxu0 0.0
        %353 = vmatpush.msra.mxu0 0.0
        %354 = vmatpush.msra.mxu0 0.0
        %355 = vmatpush.msra.mxu0 0.0
        %356 = vmatpush.msra.mxu0 0.0
        %v357 = vand.u32 %v209, 4294901760
        %v358 = vsub.f32 %v209, %v357
        %v359 = vand.u32 %v358, 4294901760
        %360 = vmatpush.msra.mxu0 %v359
        %v361 = vand.u32 %v208, 4294901760
        %v362 = vsub.f32 %v208, %v361
        %v363 = vand.u32 %v362, 4294901760
        %364 = vmatpush.msra.mxu0 %v363
        %v365 = vand.u32 %v207, 4294901760
        %v366 = vsub.f32 %v207, %v365
        %v367 = vand.u32 %v366, 4294901760
        %368 = vmatpush.msra.mxu0 %v367
        %v369 = vand.u32 %v206, 4294901760
        %v370 = vsub.f32 %v206, %v369
        %v371 = vand.u32 %v370, 4294901760
        %372 = vmatpush.msra.mxu0 %v371
        %v373 = vand.u32 %v216, 4294901760
        %374 = vmatmul.f32.gmra.mxu0 %v373
        %v375 = vpop.f32.mrf.mxu0
        %v376 = vadd.f32 %v343, %v375
        %377 = vdwg.mxu0
        %378 = vmatpush.msra.mxu0 0.0
        %379 = vmatpush.msra.mxu0 0.0
        %380 = vmatpush.msra.mxu0 0.0
        %381 = vmatpush.msra.mxu0 0.0
        %382 = vmatpush.msra.mxu0 0.0
        %383 = vmatpush.msra.mxu0 0.0
        %384 = vmatpush.msra.mxu0 0.0
        %385 = vmatpush.msra.mxu0 0.0
        %386 = vmatpush.msra.mxu0 0.0
        %387 = vmatpush.msra.mxu0 0.0
        %388 = vmatpush.msra.mxu0 0.0
        %389 = vmatpush.msra.mxu0 0.0
        %v390 = vand.u32 %v209, 4294901760
        %391 = vmatpush.msra.mxu0 %v390
        %v392 = vand.u32 %v208, 4294901760
        %393 = vmatpush.msra.mxu0 %v392
        %v394 = vand.u32 %v207, 4294901760
        %395 = vmatpush.msra.mxu0 %v394
        %v396 = vand.u32 %v206, 4294901760
        %397 = vmatpush.msra.mxu0 %v396
        %v398 = vand.u32 %v216, 4294901760
        %399 = vmatmul.f32.gmra.mxu0 %v398
        %v400 = vpop.f32.mrf.mxu0
        %v401 = vadd.f32 %v376, %v400
        %402 = vdwg.mxu0
        %v403 = vmax.f32 %v401, 0.0
        %vm404 = vcmask 523264
        %405 = vst.msk [vmem:[%s204] sm:$0xff] %vm404, %v403
        %s406 = sand.u32 %s97, 1
        %s407 = scalar_lea.sflag [#allocation4], %s406
        %s408 = sand.u32 %s97, 1
        %s409 = smul.addr %s408, 8
        %s410 = scalar_lea.vmem [#allocation7], %s409
        // Predicated region
        $region41: #{tpu_custom_call.1} parent=31 // pred_check
          %p411 = pneg %p107
        $region42: #{tpu_custom_call.1} parent=31 // pred_check_branch
          %413 = sbr.rel (%p411) target = $region44
        $region43: #{tpu_custom_call.1} parent=31 // pred_region
          %415 = vsyncadd %s407, 0
          %s416 = smul.addr %s21, 8
          %s417 = scalar_lea.hbm %s3, %s416
          %s419 = sshll.u32 %s410, 4
          %s420 = int_to_ptr.vmem [resolvable:$true] %s419
          %s421 = sshll.u32 %s417, 4
          %s422 = int_to_ptr.hbm [resolvable:$true] %s421
          %424 = dma.vmem_to_hbm [thread:$0]  %s420, 128, %s422, %s407
        $region44: #{tpu_custom_call.1} parent=31 // pred_fallthru
          _
      $region32: #{tpu_custom_call.1} parent=5 // pred_fallthru
        _
      %p425 = scmp.le.s32.totalorder 2, %s16
      // Predicated region
      $region45: #{tpu_custom_call.1} parent=5 // pred_check
        %p426 = pneg %p425
      $region46: #{tpu_custom_call.1} parent=5 // pred_check_branch
        %428 = sbr.rel (%p426) target = $region48
      $region47: #{tpu_custom_call.1} parent=5 // pred_region
        %s429 = ssub.s32 %s16, 2
        // Predicated region
        $region49: #{tpu_custom_call.1} parent=47 // pred_check
          %p430 = pneg %p113
        $region50: #{tpu_custom_call.1} parent=47 // pred_check_branch
          %432 = sbr.rel (%p430) target = $region52
        $region51: #{tpu_custom_call.1} parent=47 // pred_region
          %s433 = sand.u32 %s98, 1
          %s434 = scalar_lea.sflag [#allocation4], %s433
          %s435 = sand.u32 %s98, 1
          %s436 = smul.addr %s435, 8
          %s437 = scalar_lea.vmem [#allocation7], %s436
          %439 = dma.done %s434, 128
        $region52: #{tpu_custom_call.1} parent=47 // pred_fallthru
          _
      $region48: #{tpu_custom_call.1} parent=5 // pred_fallthru
        _
    $region6: #{tpu_custom_call.1} parent=1 // loop_footer
      %s20 = sadd.s32 1, %s16
    $region7: #{tpu_custom_call.1} parent=1 // loop_footer_branch
      %15 = sbr.rel target = $region3
    $region8: #{tpu_custom_call.1} parent=1 // loop_exit
      _
    %440 = vsyncpa [#allocation3], 1
    %s441 = scalar_lea.sflag [#allocation3], 1
    %442 = vsyncpa %s441, 1
    %443 = vsyncpa [#allocation6], 1
    %444 = vsyncpa [#allocation4], 1
    %s445 = scalar_lea.sflag [#allocation4], 1
    %446 = vsyncpa %s445, 1

</llo_original>
